<compile_context>
chip_gen: v5e
topology: v5e:2x2
jax: 0.10.0
libtpu: 0.0.40
codegen_flags: <defaults>
</compile_context>

<pallas_src>
import functools
import math

import jax
import jax.numpy as jnp
from jax.experimental import pallas as pl
from jax.experimental.pallas import tpu as pltpu


def _auto_bf16_softplus():
    """bf16 EUP softplus only on v6e / v7x; f32 elsewhere (v5e has no bf16 EUP)."""
    try:
        kind = jax.devices()[0].device_kind.lower()
    except Exception:  # pragma: no cover - defensive
        return False
    return ("v6" in kind) or ("v7" in kind)


def _batch_tile(B, S, target_rows=512, min_steps=4):
    """Batch rows per grid step: multiple of 8, R = tb*S near target_rows, and
    at least min(min_steps, B/8) grid steps so the pipeline / both v7x cores
    have work."""
    Bp8 = pl.cdiv(B, 8) * 8
    tb = max(8, (target_rows // max(S, 1)) // 8 * 8)
    tb = min(tb, Bp8)
    steps = min(min_steps, Bp8 // 8)
    if steps > 1:
        tb = min(tb, max(8, (Bp8 // steps) // 8 * 8))
    return tb


def _vae_logprob_kernel(z_ref, x_ref, loc_ref, c0_ref, inv2v_ref,
                        w1_ref, b1_ref, w2_ref, b2_ref, w3_ref, b3_ref,
                        out_ref, *, bf16_softplus):
    tb, s, l = z_ref.shape
    dp = x_ref.shape[-1]

    z3 = z_ref[...]                                             # (TB, S, L) f32

    # ---- log p(z): constants hoisted to the wrapper ----------------------------
    dz = z3 - loc_ref[...]                                      # (1, L) broadcasts
    log_p_z = jnp.sum(c0_ref[...] - dz * dz * inv2v_ref[...], axis=-1)   # (TB, S)

    # ---- generative MLP on the MXU: bf16 operands, f32 accumulation ------------
    z2 = z3.reshape(tb * s, l).astype(jnp.bfloat16)
    h1 = jnp.dot(z2, w1_ref[...], preferred_element_type=jnp.float32) + b1_ref[...]
    h1 = jnp.maximum(h1, 0.0)
    h2 = jnp.dot(h1.astype(jnp.bfloat16), w2_ref[...],
                 preferred_element_type=jnp.float32) + b2_ref[...]
    h2 = jnp.maximum(h2, 0.0)
    logits = jnp.dot(h2.astype(jnp.bfloat16), w3_ref[...],
                     preferred_element_type=jnp.float32) + b3_ref[...]   # (R, Dp)
    logits = logits.reshape(tb, s, dp)                          # (TB, S, Dp)

    # ---- Bernoulli log prob = -BCEWithLogits(logits, x), stable form -----------
    # x is (TB, Dp): broadcast over the sample dim inside the tile.
    # Padded data lanes (if any) carry logits = -30, x = 0 -> BCE ~ 1e-13, so no
    # mask tensor is needed.
    x = x_ref[...][:, None, :]                                  # (TB, 1, Dp)
    neg_abs = -jnp.abs(logits)
    if bf16_softplus:   # v6e / v7x: EUP exp+log1p in bf16 (~2x packed throughput)
        sp = jnp.log1p(jnp.exp(neg_abs.astype(jnp.bfloat16))).astype(jnp.float32)
    else:               # v5e and older: no bf16 EUP path
        sp = jnp.log1p(jnp.exp(neg_abs))
    bce = jnp.maximum(logits, 0.0) - logits * x + sp
    log_p_x = -jnp.sum(bce, axis=-1)                            # (TB, S)

    # lane/sublane-dense store: flatten the (TB, S) tile into one (1, 8, TB*S/8) slab
    out_ref[...] = (log_p_z + log_p_x).reshape(out_ref.shape)


def vae_log_prob(z, x, params, *, target_rows=512, use_bf16_softplus=None,
                 interpret=False):
    """z: (B, S, L) f32, x: (B, D) f32 in [0,1] -> (B, S, 1) f32."""
    B, S, L = z.shape
    D = x.shape[-1]
    loc, scale, w1, b1, w2, b2, w3, b3 = params
    H = w1.shape[1]

    if use_bf16_softplus is None:
        use_bf16_softplus = _auto_bf16_softplus()

    # ---- host-side prep: hoisted Gaussian constants, bf16 weights --------------
    var = (scale.astype(jnp.float32) ** 2).reshape(1, L)
    c0 = -0.5 * jnp.log(2.0 * math.pi * var)                    # (1, L)
    inv2v = 1.0 / (2.0 * var)                                   # (1, L)
    loc2 = loc.astype(jnp.float32).reshape(1, L)

    # ---- lane padding of the data dim -------------------------------------------
    # Padded lanes self-mask: w3 pad = 0, b3 pad = -30 (finite), x pad = 0
    # => BCE contribution ~1e-13 per padded lane; no mask tensor needed.
    if D % 128 != 0 and D > 128:
        Dp = pl.cdiv(D, 128) * 128
    else:
        Dp = D
    pad_d = Dp - D
    x_p = jnp.pad(x.astype(jnp.float32), ((0, 0), (0, pad_d)))
    w3_p = jnp.pad(w3.astype(jnp.float32), ((0, 0), (0, pad_d)))
    b3_p = jnp.pad(b3.astype(jnp.float32), ((0, 0), (0, pad_d)),
                   constant_values=-30.0)

    # ---- batch tiling: multiple grid steps, R = tb*S bounded near target_rows ---
    # TODO(synk): for very large n_samples (S >> 512) the (R, Dp) f32 BCE
    # intermediate should additionally be chunked over the sample dim.
    tb = _batch_tile(B, S, target_rows=target_rows)
    Bp = pl.cdiv(B, tb) * tb
    n_tiles = Bp // tb
    z_p = jnp.pad(z.astype(jnp.float32), ((0, Bp - B), (0, 0), (0, 0)))
    x_p = jnp.pad(x_p, ((0, Bp - B), (0, 0)))

    # bf16 weights (halve VMEM + 2x MXU); biases stay f32 (added post-accumulation)
    w1b = w1.astype(jnp.bfloat16)
    w2b = w2.astype(jnp.bfloat16)
    w3b = w3_p.astype(jnp.bfloat16)
    b1f = b1.astype(jnp.float32)
    b2f = b2.astype(jnp.float32)
    b3f = b3_p.astype(jnp.float32)

    # ---- VMEM budget: computed working set (<= 32 MiB; v7x only has 64 MiB) ----
    rows = tb * S
    vmem_est = (
        2 * 4 * (tb * S * L + tb * Dp)          # double-buffered z / x tiles (f32)
        + 2 * 4 * rows                          # double-buffered output slab
        + 2 * (L * H + H * H + H * Dp)          # resident bf16 weights
        + 4 * (2 * H + Dp + 3 * L)              # resident f32 biases + constants
        + 4 * rows * (2 * H + 3 * Dp)           # live f32 h1/h2/logits/bce temps
    )
    vmem_limit = int(min(32 * 1024 * 1024, max(8 * 1024 * 1024, 2 * vmem_est)))

    resident = lambda shape: pl.BlockSpec(shape, lambda i: (0,) * len(shape))

    kernel = functools.partial(_vae_logprob_kernel,
                               bf16_softplus=bool(use_bf16_softplus))

    out = pl.pallas_call(
        kernel,
        out_shape=jax.ShapeDtypeStruct((n_tiles, 8, rows // 8), jnp.float32),
        grid=(n_tiles,),
        in_specs=[
            pl.BlockSpec((tb, S, L), lambda i: (i, 0, 0)),   # z tile
            pl.BlockSpec((tb, Dp), lambda i: (i, 0)),        # x tile
            resident((1, L)),                                # loc
            resident((1, L)),                                # -0.5*log(2*pi*var)
            resident((1, L)),                                # 1/(2*var)
            resident((L, H)), resident((1, H)),              # w1, b1
            resident((H, H)), resident((1, H)),              # w2, b2
            resident((H, Dp)), resident((1, Dp)),            # w3, b3
        ],
        out_specs=pl.BlockSpec((1, 8, rows // 8), lambda i: (i, 0, 0)),
        compiler_params=pltpu.CompilerParams(
            dimension_semantics=("parallel",),
            vmem_limit_bytes=vmem_limit),
        interpret=interpret,
    )(z_p, x_p, loc2, c0, inv2v, w1b, b1f, w2b, b2f, w3b, b3f)

    # tiles are stored batch-major / sample-minor, so a plain reshape recovers (Bp, S)
    return out.reshape(Bp, S)[:B][:, :, None]                   # (B, S, 1)


def init_params(key, latent_size, data_size):
    """Deterministic parameter init matching the module's shapes (weights as (in, out))."""
    hidden = latent_size * 2
    ks = jax.random.split(key, 6)

    def lin(kw, kb, fan_in, fan_out):
        bound = 1.0 / math.sqrt(fan_in)
        w = jax.random.uniform(kw, (fan_in, fan_out), jnp.float32, -bound, bound)
        b = jax.random.uniform(kb, (1, fan_out), jnp.float32, -bound, bound)
        return w, b

    w1, b1 = lin(ks[0], ks[1], latent_size, hidden)
    w2, b2 = lin(ks[2], ks[3], hidden, hidden)
    w3, b3 = lin(ks[4], ks[5], hidden, data_size)
    loc = jnp.zeros((1, latent_size), jnp.float32)     # p_z_loc buffer
    scale = jnp.ones((1, latent_size), jnp.float32)    # p_z_scale buffer
    return (loc, scale, w1, b1, w2, b2, w3, b3)


def vae_log_prob_ref(z, x, params, *, use_bf16_softplus=False):
    """Pure-JAX reference mirroring the kernel's numerics (bf16 matmul operands,
    f32 accumulation, optional bf16 softplus term)."""
    loc, scale, w1, b1, w2, b2, w3, b3 = params
    var = scale * scale
    log_p_z = jnp.sum(-0.5 * jnp.log(2.0 * math.pi * var) - (z - loc) ** 2 / (2.0 * var),
                      axis=-1, keepdims=True)

    def mm(a, w):
        return jnp.dot(a.astype(jnp.bfloat16), w.astype(jnp.bfloat16),
                       preferred_element_type=jnp.float32)

    h1 = jnp.maximum(mm(z, w1) + b1, 0.0)
    h2 = jnp.maximum(mm(h1, w2) + b2, 0.0)
    logits = mm(h2, w3) + b3
    xb = x[:, None, :]
    neg_abs = -jnp.abs(logits)
    if use_bf16_softplus:
        sp = jnp.log1p(jnp.exp(neg_abs.astype(jnp.bfloat16))).astype(jnp.float32)
    else:
        sp = jnp.log1p(jnp.exp(neg_abs))
    bce = jnp.maximum(logits, 0.0) - logits * xb + sp
    log_p_x = jnp.sum(-bce, axis=-1, keepdims=True)
    return log_p_z + log_p_x


if __name__ == "__main__":
    batch, n_samples, latent_size, data_size = 32, 8, 16, 128

    key = jax.random.PRNGKey(0)
    k_z, k_x, k_p = jax.random.split(key, 3)

    z = jax.random.normal(k_z, (batch, n_samples, latent_size), jnp.float32)
    x = jax.random.uniform(k_x, (batch, data_size), jnp.float32)   # targets in [0, 1]

    params = init_params(k_p, latent_size, data_size)

    bf16_sp = _auto_bf16_softplus()
    # batch=32, S=8 -> tb=8 -> grid=(4,): multiple pipelined steps, even count.
    out = vae_log_prob(z, x, params, use_bf16_softplus=bf16_sp)
    out = jax.block_until_ready(out)

    ref = vae_log_prob_ref(z, x, params, use_bf16_softplus=bf16_sp)
    assert out.shape == (batch, n_samples, 1), out.shape
    assert jnp.allclose(out, ref, atol=1e-1, rtol=1e-2), float(
        jnp.max(jnp.abs(out - ref)))

    print("KERNEL_OK")
</pallas_src>

<mosaic_0001>
module attributes {stable_mosaic.version = 11 : i64} {
  func.func @_vae_logprob_kernel(%arg0: i32, %arg1: memref<8x8x16xf32, #tpu.memory_space<vmem>>, %arg2: memref<8x128xf32, #tpu.memory_space<vmem>>, %arg3: memref<1x16xf32, #tpu.memory_space<vmem>>, %arg4: memref<1x16xf32, #tpu.memory_space<vmem>>, %arg5: memref<1x16xf32, #tpu.memory_space<vmem>>, %arg6: memref<16x32xbf16, #tpu.memory_space<vmem>>, %arg7: memref<1x32xf32, #tpu.memory_space<vmem>>, %arg8: memref<32x32xbf16, #tpu.memory_space<vmem>>, %arg9: memref<1x32xf32, #tpu.memory_space<vmem>>, %arg10: memref<32x128xbf16, #tpu.memory_space<vmem>>, %arg11: memref<1x128xf32, #tpu.memory_space<vmem>>, %arg12: memref<1x8x8xf32, #tpu.memory_space<vmem>>) attributes {dimension_semantics = [#tpu.dimension_semantics<parallel>], iteration_bounds = array<i64: 4>, scalar_prefetch = 0 : i64, scratch_operands = 0 : i64, tpu.core_type = #tpu.core_type<tc>, window_params = [{transform_indices = @transform_0, window_bounds = array<i64: 8, 8, 16>}, {transform_indices = @transform_1, window_bounds = array<i64: 8, 128>}, {pipeline_mode = #tpu.pipeline_mode<synchronous>, transform_indices = @transform_2, window_bounds = array<i64: 1, 16>}, {pipeline_mode = #tpu.pipeline_mode<synchronous>, transform_indices = @transform_3, window_bounds = array<i64: 1, 16>}, {pipeline_mode = #tpu.pipeline_mode<synchronous>, transform_indices = @transform_4, window_bounds = array<i64: 1, 16>}, {pipeline_mode = #tpu.pipeline_mode<synchronous>, transform_indices = @transform_5, window_bounds = array<i64: 16, 32>}, {pipeline_mode = #tpu.pipeline_mode<synchronous>, transform_indices = @transform_6, window_bounds = array<i64: 1, 32>}, {pipeline_mode = #tpu.pipeline_mode<synchronous>, transform_indices = @transform_7, window_bounds = array<i64: 32, 32>}, {pipeline_mode = #tpu.pipeline_mode<synchronous>, transform_indices = @transform_8, window_bounds = array<i64: 1, 32>}, {pipeline_mode = #tpu.pipeline_mode<synchronous>, transform_indices = @transform_9, window_bounds = array<i64: 32, 128>}, {pipeline_mode = #tpu.pipeline_mode<synchronous>, transform_indices = @transform_10, window_bounds = array<i64: 1, 128>}, {transform_indices = @transform_11, window_bounds = array<i64: 1, 8, 8>}]} {
    %c0 = arith.constant 0 : index
    %c0_0 = arith.constant 0 : index
    %c0_1 = arith.constant 0 : index
    %0 = vector.load %arg1[%c0, %c0_0, %c0_1] : memref<8x8x16xf32, #tpu.memory_space<vmem>>, vector<8x8x16xf32>
    %c0_2 = arith.constant 0 : index
    %c0_3 = arith.constant 0 : index
    %1 = vector.load %arg3[%c0_2, %c0_3] : memref<1x16xf32, #tpu.memory_space<vmem>>, vector<1x16xf32>
    %2 = vector.shape_cast %1 : vector<1x16xf32> to vector<1x1x16xf32>
    %3 = vector.broadcast %2 : vector<1x1x16xf32> to vector<8x8x16xf32>
    %4 = arith.subf %0, %3 : vector<8x8x16xf32>
    %c0_4 = arith.constant 0 : index
    %c0_5 = arith.constant 0 : index
    %5 = vector.load %arg4[%c0_4, %c0_5] : memref<1x16xf32, #tpu.memory_space<vmem>>, vector<1x16xf32>
    %6 = arith.mulf %4, %4 : vector<8x8x16xf32>
    %c0_6 = arith.constant 0 : index
    %c0_7 = arith.constant 0 : index
    %7 = vector.load %arg5[%c0_6, %c0_7] : memref<1x16xf32, #tpu.memory_space<vmem>>, vector<1x16xf32>
    %8 = vector.shape_cast %7 : vector<1x16xf32> to vector<1x1x16xf32>
    %9 = vector.broadcast %8 : vector<1x1x16xf32> to vector<8x8x16xf32>
    %10 = arith.mulf %6, %9 : vector<8x8x16xf32>
    %11 = vector.shape_cast %5 : vector<1x16xf32> to vector<1x1x16xf32>
    %12 = vector.broadcast %11 : vector<1x1x16xf32> to vector<8x8x16xf32>
    %13 = arith.subf %12, %10 : vector<8x8x16xf32>
    %cst = arith.constant dense<0.000000e+00> : vector<8x8xf32>
    %14 = vector.multi_reduction <add>, %13, %cst [2] : vector<8x8x16xf32> to vector<8x8xf32>
    %15 = vector.shape_cast %0 : vector<8x8x16xf32> to vector<64x16xf32>
    %16 = arith.truncf %15 : vector<64x16xf32> to vector<64x16xbf16>
    %c0_8 = arith.constant 0 : index
    %c0_9 = arith.constant 0 : index
    %17 = vector.load %arg6[%c0_8, %c0_9] : memref<16x32xbf16, #tpu.memory_space<vmem>>, vector<16x32xbf16>
    %cst_10 = arith.constant dense<0.000000e+00> : vector<64x32xf32>
    %18 = tpu.matmul %16, %17, %cst_10 {dimension_numbers = #tpu.dot_dimension_numbers<[1], [0], [0], [1], [0, 0, 1, 1], [], []>} : vector<64x16xbf16>, vector<16x32xbf16>, vector<64x32xf32> -> vector<64x32xf32>
    %c0_11 = arith.constant 0 : index
    %c0_12 = arith.constant 0 : index
    %19 = vector.load %arg7[%c0_11, %c0_12] : memref<1x32xf32, #tpu.memory_space<vmem>>, vector<1x32xf32>
    %20 = vector.broadcast %19 : vector<1x32xf32> to vector<64x32xf32>
    %21 = arith.addf %18, %20 : vector<64x32xf32>
    %cst_13 = arith.constant 0.000000e+00 : f32
    %22 = vector.broadcast %cst_13 : f32 to vector<64x32xf32>
    %23 = arith.maximumf %21, %22 : vector<64x32xf32>
    %24 = arith.truncf %23 : vector<64x32xf32> to vector<64x32xbf16>
    %c0_14 = arith.constant 0 : index
    %c0_15 = arith.constant 0 : index
    %25 = vector.load %arg8[%c0_14, %c0_15] : memref<32x32xbf16, #tpu.memory_space<vmem>>, vector<32x32xbf16>
    %cst_16 = arith.constant dense<0.000000e+00> : vector<64x32xf32>
    %26 = tpu.matmul %24, %25, %cst_16 {dimension_numbers = #tpu.dot_dimension_numbers<[1], [0], [0], [1], [0, 0, 1, 1], [], []>} : vector<64x32xbf16>, vector<32x32xbf16>, vector<64x32xf32> -> vector<64x32xf32>
    %c0_17 = arith.constant 0 : index
    %c0_18 = arith.constant 0 : index
    %27 = vector.load %arg9[%c0_17, %c0_18] : memref<1x32xf32, #tpu.memory_space<vmem>>, vector<1x32xf32>
    %28 = vector.broadcast %27 : vector<1x32xf32> to vector<64x32xf32>
    %29 = arith.addf %26, %28 : vector<64x32xf32>
    %cst_19 = arith.constant 0.000000e+00 : f32
    %30 = vector.broadcast %cst_19 : f32 to vector<64x32xf32>
    %31 = arith.maximumf %29, %30 : vector<64x32xf32>
    %32 = arith.truncf %31 : vector<64x32xf32> to vector<64x32xbf16>
    %c0_20 = arith.constant 0 : index
    %c0_21 = arith.constant 0 : index
    %33 = vector.load %arg10[%c0_20, %c0_21] : memref<32x128xbf16, #tpu.memory_space<vmem>>, vector<32x128xbf16>
    %cst_22 = arith.constant dense<0.000000e+00> : vector<64x128xf32>
    %34 = tpu.matmul %32, %33, %cst_22 {dimension_numbers = #tpu.dot_dimension_numbers<[1], [0], [0], [1], [0, 0, 1, 1], [], []>} : vector<64x32xbf16>, vector<32x128xbf16>, vector<64x128xf32> -> vector<64x128xf32>
    %c0_23 = arith.constant 0 : index
    %c0_24 = arith.constant 0 : index
    %35 = vector.load %arg11[%c0_23, %c0_24] : memref<1x128xf32, #tpu.memory_space<vmem>>, vector<1x128xf32>
    %36 = vector.broadcast %35 : vector<1x128xf32> to vector<64x128xf32>
    %37 = arith.addf %34, %36 : vector<64x128xf32>
    %38 = vector.shape_cast %37 : vector<64x128xf32> to vector<8x8x128xf32>
    %c0_25 = arith.constant 0 : index
    %c0_26 = arith.constant 0 : index
    %39 = vector.load %arg2[%c0_25, %c0_26] : memref<8x128xf32, #tpu.memory_space<vmem>>, vector<8x128xf32>
    %40 = vector.shape_cast %39 : vector<8x128xf32> to vector<8x1x128xf32>
    %41 = math.absf %38 : vector<8x8x128xf32>
    %cst_27 = arith.constant 0.000000e+00 : f32
    %42 = vector.broadcast %cst_27 : f32 to vector<8x8x128xf32>
    %43 = arith.subf %42, %41 : vector<8x8x128xf32>
    %44 = math.exp %43 : vector<8x8x128xf32>
    %45 = math.log1p %44 : vector<8x8x128xf32>
    %cst_28 = arith.constant 0.000000e+00 : f32
    %46 = vector.broadcast %cst_28 : f32 to vector<8x8x128xf32>
    %47 = arith.maximumf %38, %46 : vector<8x8x128xf32>
    %48 = vector.broadcast %40 : vector<8x1x128xf32> to vector<8x8x128xf32>
    %49 = arith.mulf %38, %48 : vector<8x8x128xf32>
    %50 = arith.subf %47, %49 : vector<8x8x128xf32>
    %51 = arith.addf %50, %45 : vector<8x8x128xf32>
    %cst_29 = arith.constant dense<0.000000e+00> : vector<8x8xf32>
    %52 = vector.multi_reduction <add>, %51, %cst_29 [2] : vector<8x8x128xf32> to vector<8x8xf32>
    %cst_30 = arith.constant 0.000000e+00 : f32
    %53 = vector.broadcast %cst_30 : f32 to vector<8x8xf32>
    %54 = arith.subf %53, %52 : vector<8x8xf32>
    %55 = arith.addf %14, %54 : vector<8x8xf32>
    %56 = vector.shape_cast %55 : vector<8x8xf32> to vector<1x8x8xf32>
    %c0_31 = arith.constant 0 : index
    %c0_32 = arith.constant 0 : index
    %c0_33 = arith.constant 0 : index
    %57 = vector.load %arg12[%c0_31, %c0_32, %c0_33] : memref<1x8x8xf32, #tpu.memory_space<vmem>>, vector<1x8x8xf32>
    tpu.vector_store %arg12[%c0_31, %c0_32, %c0_33], %56 {strides = array<i32>} : memref<1x8x8xf32, #tpu.memory_space<vmem>>, vector<1x8x8xf32>,
    return
  }
  func.func @transform_0(%arg0: i32) -> (i32, i32, i32) {
    %c0_i32 = arith.constant 0 : i32
    %c0_i32_0 = arith.constant 0 : i32
    %c0_i32_1 = arith.constant 0 : i32
    return %arg0, %c0_i32, %c0_i32_0 : i32, i32, i32
  }
  func.func @transform_1(%arg0: i32) -> (i32, i32) {
    %c0_i32 = arith.constant 0 : i32
    %c0_i32_0 = arith.constant 0 : i32
    return %arg0, %c0_i32 : i32, i32
  }
  func.func @transform_2(%arg0: i32) -> (i32, i32) {
    %c0_i32 = arith.constant 0 : i32
    %c0_i32_0 = arith.constant 0 : i32
    %c0_i32_1 = arith.constant 0 : i32
    return %c0_i32, %c0_i32_0 : i32, i32
  }
  func.func @transform_3(%arg0: i32) -> (i32, i32) {
    %c0_i32 = arith.constant 0 : i32
    %c0_i32_0 = arith.constant 0 : i32
    %c0_i32_1 = arith.constant 0 : i32
    return %c0_i32, %c0_i32_0 : i32, i32
  }
  func.func @transform_4(%arg0: i32) -> (i32, i32) {
    %c0_i32 = arith.constant 0 : i32
    %c0_i32_0 = arith.constant 0 : i32
    %c0_i32_1 = arith.constant 0 : i32
    return %c0_i32, %c0_i32_0 : i32, i32
  }
  func.func @transform_5(%arg0: i32) -> (i32, i32) {
    %c0_i32 = arith.constant 0 : i32
    %c0_i32_0 = arith.constant 0 : i32
    %c0_i32_1 = arith.constant 0 : i32
    return %c0_i32, %c0_i32_0 : i32, i32
  }
  func.func @transform_6(%arg0: i32) -> (i32, i32) {
    %c0_i32 = arith.constant 0 : i32
    %c0_i32_0 = arith.constant 0 : i32
    %c0_i32_1 = arith.constant 0 : i32
    return %c0_i32, %c0_i32_0 : i32, i32
  }
  func.func @transform_7(%arg0: i32) -> (i32, i32) {
    %c0_i32 = arith.constant 0 : i32
    %c0_i32_0 = arith.constant 0 : i32
    %c0_i32_1 = arith.constant 0 : i32
    return %c0_i32, %c0_i32_0 : i32, i32
  }
  func.func @transform_8(%arg0: i32) -> (i32, i32) {
    %c0_i32 = arith.constant 0 : i32
    %c0_i32_0 = arith.constant 0 : i32
    %c0_i32_1 = arith.constant 0 : i32
    return %c0_i32, %c0_i32_0 : i32, i32
  }
  func.func @transform_9(%arg0: i32) -> (i32, i32) {
    %c0_i32 = arith.constant 0 : i32
    %c0_i32_0 = arith.constant 0 : i32
    %c0_i32_1 = arith.constant 0 : i32
    return %c0_i32, %c0_i32_0 : i32, i32
  }
  func.func @transform_10(%arg0: i32) -> (i32, i32) {
    %c0_i32 = arith.constant 0 : i32
    %c0_i32_0 = arith.constant 0 : i32
    %c0_i32_1 = arith.constant 0 : i32
    return %c0_i32, %c0_i32_0 : i32, i32
  }
  func.func @transform_11(%arg0: i32) -> (i32, i32, i32) {
    %c0_i32 = arith.constant 0 : i32
    %c0_i32_0 = arith.constant 0 : i32
    %c0_i32_1 = arith.constant 0 : i32
    return %arg0, %c0_i32, %c0_i32_0 : i32, i32, i32
  }
}

</mosaic_0001>

<llo_original>
// kernel: tpu_custom_call.1
$region0: #{tpu_custom_call.1}
  #allocation0 [shape = 'u32[]', space=smem, size = 0x4, offset = 0x4, fixed_abs, tag = 'smem constant byte address 0x4 - core index']
  #allocation1 [shape = 'u32[72,128]{1,0:T(1,128)}', space=vmem, size = 0x9000, scoped, tag = 'internal scratch']
  %s0 = inlined_call_operand.vmem [shape: f32[32,8,16], index: 0, kind: input, shape index: {}]
  %s1 = inlined_call_operand.vmem [shape: f32[32,128], index: 1, kind: input, shape index: {}]
  %s2 = inlined_call_operand.vmem [shape: f32[1,16], index: 2, kind: input, shape index: {}]
  %s3 = inlined_call_operand.vmem [shape: f32[1,16], index: 3, kind: input, shape index: {}]
  %s4 = inlined_call_operand.vmem [shape: f32[1,16], index: 4, kind: input, shape index: {}]
  %s5 = inlined_call_operand.vmem [shape: bf16[16,32], index: 5, kind: input, shape index: {}]
  %s6 = inlined_call_operand.vmem [shape: f32[1,32], index: 6, kind: input, shape index: {}]
  %s7 = inlined_call_operand.vmem [shape: bf16[32,32], index: 7, kind: input, shape index: {}]
  %s8 = inlined_call_operand.vmem [shape: f32[1,32], index: 8, kind: input, shape index: {}]
  %s9 = inlined_call_operand.vmem [shape: bf16[32,128], index: 9, kind: input, shape index: {}]
  %s10 = inlined_call_operand.vmem [shape: f32[1,128], index: 10, kind: input, shape index: {}]
  %s11 = inlined_call_operand.hbm [shape: f32[4,8,8], index: 11, kind: output, shape index: {}]
  %s12 = sld [smem:[#allocation0]]
  $region77: #{tpu_custom_call.1} parent=0
    _
  %s14 = ssub.s32 1, %s12
  %s15 = scalar_select 0, %s14, %s12
  $region1: #{tpu_custom_call.1} parent=0
    #allocation2 [shape = 'u8[8192]{0}', space=vmem, size = 0x2000, scoped, tag = 'output window, operand 0']
    #allocation3 [shape = 's32[2]{0}', space=sflag, size = 0x8, scoped, tag = 'scoped memory for tpu_custom_call.1']
    %16 = vsyncpa [#allocation3], 0
    %s17 = scalar_lea.sflag [#allocation3], 1
    %18 = vsyncpa %s17, 0
    loop: start=0, step=1, limit=6
    $region2: #{tpu_custom_call.1} parent=1 // loop_pre_header
      _
    $region3: #{tpu_custom_call.1} parent=1 // loop_header
      %s20 = sphi 0, %s24
      %p21 = scmp.ge.s32.totalorder %s20, 6
      %s30 = sphi 0, %s32
      %s33 = sphi 0, %s30
      %s34 = sphi 0, %s33
      %s50 = sphi 0, %s34
      %s56 = sphi 0, %s58
      %s59 = sphi 0, %s56
      %s60 = sphi 0, %s59
      %s76 = sphi 0, %s60
      %s80 = sphi 0, %s80
      %s82 = sphi 0, %s80
      %s83 = sphi 0, %s82
      %s97 = sphi 0, %s83
      %s101 = sphi 0, %s101
      %s103 = sphi 0, %s101
      %s104 = sphi 0, %s103
      %s118 = sphi 0, %s104
      %s122 = sphi 0, %s122
      %s124 = sphi 0, %s122
      %s125 = sphi 0, %s124
      %s139 = sphi 0, %s125
      %s143 = sphi 0, %s143
      %s145 = sphi 0, %s143
      %s146 = sphi 0, %s145
      %s160 = sphi 0, %s146
      %s164 = sphi 0, %s164
      %s166 = sphi 0, %s164
      %s167 = sphi 0, %s166
      %s181 = sphi 0, %s167
      %s185 = sphi 0, %s185
      %s187 = sphi 0, %s185
      %s188 = sphi 0, %s187
      %s202 = sphi 0, %s188
      %s206 = sphi 0, %s206
      %s208 = sphi 0, %s206
      %s209 = sphi 0, %s208
      %s223 = sphi 0, %s209
      %s227 = sphi 0, %s227
      %s229 = sphi 0, %s227
      %s230 = sphi 0, %s229
      %s244 = sphi 0, %s230
      %s248 = sphi 0, %s248
      %s250 = sphi 0, %s248
      %s251 = sphi 0, %s250
      %s265 = sphi 0, %s251
      %s271 = sphi 0, %s273
      %s274 = sphi 0, %s271
      %s275 = sphi 0, %s274
      %s291 = sphi 0, %s275
    $region4: #{tpu_custom_call.1} parent=1 // loop_header_branch
      %23 = sbr.rel (%p21) target = $region8
    $region5: #{tpu_custom_call.1} parent=1 // loop_body
      %s25 = ssub.s32 %s20, 1
      %s26 = ssub.s32 %s20, 2
      %s27 = sadd.s32 %s20, 1
      %s28 = ssub.s32 %s20, %s27
      %p29 = scmp.eq.s32.totalorder %s28, 0
      %s31 = sadd.s32 %s30, 1
      %s32 = scalar_select %p29, %s30, %s31
      %p35 = pneg %p29
      %p36 = scmp.eq.s32.totalorder %s20, 3
      %p37 = por %p35, %p36
      %p38 = scmp.ne.s32.totalorder %s30, %s33
      %p39 = scmp.eq.s32.totalorder %s20, 0
      %p40 = por %p38, %p39
      %p41 = scmp.ne.s32.totalorder %s30, %s33
      %p42 = scmp.eq.s32.totalorder %s25, 3
      %p43 = por %p41, %p42
      %p44 = scmp.ne.s32.totalorder %s33, %s34
      %p45 = scmp.eq.s32.totalorder %s25, 0
      %p46 = por %p44, %p45
      %p47 = scmp.ne.s32.totalorder %s33, %s34
      %p48 = scmp.eq.s32.totalorder %s26, 3
      %p49 = por %p47, %p48
      %p51 = scmp.ne.s32.totalorder %s34, %s50
      %p52 = scmp.eq.s32.totalorder %s26, 0
      %p53 = por %p51, %p52
      %s54 = ssub.s32 %s20, %s27
      %p55 = scmp.eq.s32.totalorder %s54, 0
      %s57 = sadd.s32 %s56, 1
      %s58 = scalar_select %p55, %s56, %s57
      %p61 = pneg %p55
      %p62 = scmp.eq.s32.totalorder %s20, 3
      %p63 = por %p61, %p62
      %p64 = scmp.ne.s32.totalorder %s56, %s59
      %p65 = scmp.eq.s32.totalorder %s20, 0
      %p66 = por %p64, %p65
      %p67 = scmp.ne.s32.totalorder %s56, %s59
      %p68 = scmp.eq.s32.totalorder %s25, 3
      %p69 = por %p67, %p68
      %p70 = scmp.ne.s32.totalorder %s59, %s60
      %p71 = scmp.eq.s32.totalorder %s25, 0
      %p72 = por %p70, %p71
      %p73 = scmp.ne.s32.totalorder %s59, %s60
      %p74 = scmp.eq.s32.totalorder %s26, 3
      %p75 = por %p73, %p74
      %p77 = scmp.ne.s32.totalorder %s60, %s76
      %p78 = scmp.eq.s32.totalorder %s26, 0
      %p79 = por %p77, %p78
      %s81 = sadd.s32 %s80, 1
      %p84 = scmp.eq.s32.totalorder %s20, 3
      %p85 = scmp.ne.s32.totalorder %s80, %s82
      %p86 = scmp.eq.s32.totalorder %s20, 0
      %p87 = por %p85, %p86
      %p88 = scmp.ne.s32.totalorder %s80, %s82
      %p89 = scmp.eq.s32.totalorder %s25, 3
      %p90 = por %p88, %p89
      %p91 = scmp.ne.s32.totalorder %s82, %s83
      %p92 = scmp.eq.s32.totalorder %s25, 0
      %p93 = por %p91, %p92
      %p94 = scmp.ne.s32.totalorder %s82, %s83
      %p95 = scmp.eq.s32.totalorder %s26, 3
      %p96 = por %p94, %p95
      %p98 = scmp.ne.s32.totalorder %s83, %s97
      %p99 = scmp.eq.s32.totalorder %s26, 0
      %p100 = por %p98, %p99
      %s102 = sadd.s32 %s101, 1
      %p105 = scmp.eq.s32.totalorder %s20, 3
      %p106 = scmp.ne.s32.totalorder %s101, %s103
      %p107 = scmp.eq.s32.totalorder %s20, 0
      %p108 = por %p106, %p107
      %p109 = scmp.ne.s32.totalorder %s101, %s103
      %p110 = scmp.eq.s32.totalorder %s25, 3
      %p111 = por %p109, %p110
      %p112 = scmp.ne.s32.totalorder %s103, %s104
      %p113 = scmp.eq.s32.totalorder %s25, 0
      %p114 = por %p112, %p113
      %p115 = scmp.ne.s32.totalorder %s103, %s104
      %p116 = scmp.eq.s32.totalorder %s26, 3
      %p117 = por %p115, %p116
      %p119 = scmp.ne.s32.totalorder %s104, %s118
      %p120 = scmp.eq.s32.totalorder %s26, 0
      %p121 = por %p119, %p120
      %s123 = sadd.s32 %s122, 1
      %p126 = scmp.eq.s32.totalorder %s20, 3
      %p127 = scmp.ne.s32.totalorder %s122, %s124
      %p128 = scmp.eq.s32.totalorder %s20, 0
      %p129 = por %p127, %p128
      %p130 = scmp.ne.s32.totalorder %s122, %s124
      %p131 = scmp.eq.s32.totalorder %s25, 3
      %p132 = por %p130, %p131
      %p133 = scmp.ne.s32.totalorder %s124, %s125
      %p134 = scmp.eq.s32.totalorder %s25, 0
      %p135 = por %p133, %p134
      %p136 = scmp.ne.s32.totalorder %s124, %s125
      %p137 = scmp.eq.s32.totalorder %s26, 3
      %p138 = por %p136, %p137
      %p140 = scmp.ne.s32.totalorder %s125, %s139
      %p141 = scmp.eq.s32.totalorder %s26, 0
      %p142 = por %p140, %p141
      %s144 = sadd.s32 %s143, 1
      %p147 = scmp.eq.s32.totalorder %s20, 3
      %p148 = scmp.ne.s32.totalorder %s143, %s145
      %p149 = scmp.eq.s32.totalorder %s20, 0
      %p150 = por %p148, %p149
      %p151 = scmp.ne.s32.totalorder %s143, %s145
      %p152 = scmp.eq.s32.totalorder %s25, 3
      %p153 = por %p151, %p152
      %p154 = scmp.ne.s32.totalorder %s145, %s146
      %p155 = scmp.eq.s32.totalorder %s25, 0
      %p156 = por %p154, %p155
      %p157 = scmp.ne.s32.totalorder %s145, %s146
      %p158 = scmp.eq.s32.totalorder %s26, 3
      %p159 = por %p157, %p158
      %p161 = scmp.ne.s32.totalorder %s146, %s160
      %p162 = scmp.eq.s32.totalorder %s26, 0
      %p163 = por %p161, %p162
      %s165 = sadd.s32 %s164, 1
      %p168 = scmp.eq.s32.totalorder %s20, 3
      %p169 = scmp.ne.s32.totalorder %s164, %s166
      %p170 = scmp.eq.s32.totalorder %s20, 0
      %p171 = por %p169, %p170
      %p172 = scmp.ne.s32.totalorder %s164, %s166
      %p173 = scmp.eq.s32.totalorder %s25, 3
      %p174 = por %p172, %p173
      %p175 = scmp.ne.s32.totalorder %s166, %s167
      %p176 = scmp.eq.s32.totalorder %s25, 0
      %p177 = por %p175, %p176
      %p178 = scmp.ne.s32.totalorder %s166, %s167
      %p179 = scmp.eq.s32.totalorder %s26, 3
      %p180 = por %p178, %p179
      %p182 = scmp.ne.s32.totalorder %s167, %s181
      %p183 = scmp.eq.s32.totalorder %s26, 0
      %p184 = por %p182, %p183
      %s186 = sadd.s32 %s185, 1
      %p189 = scmp.eq.s32.totalorder %s20, 3
      %p190 = scmp.ne.s32.totalorder %s185, %s187
      %p191 = scmp.eq.s32.totalorder %s20, 0
      %p192 = por %p190, %p191
      %p193 = scmp.ne.s32.totalorder %s185, %s187
      %p194 = scmp.eq.s32.totalorder %s25, 3
      %p195 = por %p193, %p194
      %p196 = scmp.ne.s32.totalorder %s187, %s188
      %p197 = scmp.eq.s32.totalorder %s25, 0
      %p198 = por %p196, %p197
      %p199 = scmp.ne.s32.totalorder %s187, %s188
      %p200 = scmp.eq.s32.totalorder %s26, 3
      %p201 = por %p199, %p200
      %p203 = scmp.ne.s32.totalorder %s188, %s202
      %p204 = scmp.eq.s32.totalorder %s26, 0
      %p205 = por %p203, %p204
      %s207 = sadd.s32 %s206, 1
      %p210 = scmp.eq.s32.totalorder %s20, 3
      %p211 = scmp.ne.s32.totalorder %s206, %s208
      %p212 = scmp.eq.s32.totalorder %s20, 0
      %p213 = por %p211, %p212
      %p214 = scmp.ne.s32.totalorder %s206, %s208
      %p215 = scmp.eq.s32.totalorder %s25, 3
      %p216 = por %p214, %p215
      %p217 = scmp.ne.s32.totalorder %s208, %s209
      %p218 = scmp.eq.s32.totalorder %s25, 0
      %p219 = por %p217, %p218
      %p220 = scmp.ne.s32.totalorder %s208, %s209
      %p221 = scmp.eq.s32.totalorder %s26, 3
      %p222 = por %p220, %p221
      %p224 = scmp.ne.s32.totalorder %s209, %s223
      %p225 = scmp.eq.s32.totalorder %s26, 0
      %p226 = por %p224, %p225
      %s228 = sadd.s32 %s227, 1
      %p231 = scmp.eq.s32.totalorder %s20, 3
      %p232 = scmp.ne.s32.totalorder %s227, %s229
      %p233 = scmp.eq.s32.totalorder %s20, 0
      %p234 = por %p232, %p233
      %p235 = scmp.ne.s32.totalorder %s227, %s229
      %p236 = scmp.eq.s32.totalorder %s25, 3
      %p237 = por %p235, %p236
      %p238 = scmp.ne.s32.totalorder %s229, %s230
      %p239 = scmp.eq.s32.totalorder %s25, 0
      %p240 = por %p238, %p239
      %p241 = scmp.ne.s32.totalorder %s229, %s230
      %p242 = scmp.eq.s32.totalorder %s26, 3
      %p243 = por %p241, %p242
      %p245 = scmp.ne.s32.totalorder %s230, %s244
      %p246 = scmp.eq.s32.totalorder %s26, 0
      %p247 = por %p245, %p246
      %s249 = sadd.s32 %s248, 1
      %p252 = scmp.eq.s32.totalorder %s20, 3
      %p253 = scmp.ne.s32.totalorder %s248, %s250
      %p254 = scmp.eq.s32.totalorder %s20, 0
      %p255 = por %p253, %p254
      %p256 = scmp.ne.s32.totalorder %s248, %s250
      %p257 = scmp.eq.s32.totalorder %s25, 3
      %p258 = por %p256, %p257
      %p259 = scmp.ne.s32.totalorder %s250, %s251
      %p260 = scmp.eq.s32.totalorder %s25, 0
      %p261 = por %p259, %p260
      %p262 = scmp.ne.s32.totalorder %s250, %s251
      %p263 = scmp.eq.s32.totalorder %s26, 3
      %p264 = por %p262, %p263
      %p266 = scmp.ne.s32.totalorder %s251, %s265
      %p267 = scmp.eq.s32.totalorder %s26, 0
      %p268 = por %p266, %p267
      %s269 = ssub.s32 %s20, %s27
      %p270 = scmp.eq.s32.totalorder %s269, 0
      %s272 = sadd.s32 %s271, 1
      %s273 = scalar_select %p270, %s271, %s272
      %p276 = pneg %p270
      %p277 = scmp.eq.s32.totalorder %s20, 3
      %p278 = por %p276, %p277
      %p279 = scmp.ne.s32.totalorder %s271, %s274
      %p280 = scmp.eq.s32.totalorder %s20, 0
      %p281 = por %p279, %p280
      %p282 = scmp.ne.s32.totalorder %s271, %s274
      %p283 = scmp.eq.s32.totalorder %s25, 3
      %p284 = por %p282, %p283
      %p285 = scmp.ne.s32.totalorder %s274, %s275
      %p286 = scmp.eq.s32.totalorder %s25, 0
      %p287 = por %p285, %p286
      %p288 = scmp.ne.s32.totalorder %s274, %s275
      %p289 = scmp.eq.s32.totalorder %s26, 3
      %p290 = por %p288, %p289
      %p292 = scmp.ne.s32.totalorder %s275, %s291
      %p293 = scmp.eq.s32.totalorder %s26, 0
      %p294 = por %p292, %p293
      %p295 = scmp.le.s32.totalorder 1, %s20
      %p296 = scmp.lt.s32.totalorder %s20, 5
      %p297 = pnand %p295, %p296
      %p298 = pneg %p297
      // Predicated region
      $region9: #{tpu_custom_call.1} parent=5 // pred_check
        _
      $region10: #{tpu_custom_call.1} parent=5 // pred_check_branch
        %300 = sbr.rel (%p297) target = $region12
      $region11: #{tpu_custom_call.1} parent=5 // pred_region
        %s301 = ssub.s32 %s20, 1
        // Predicated region
        $region13: #{tpu_custom_call.1} parent=11 // pred_check
          %p302 = pneg %p93
        $region14: #{tpu_custom_call.1} parent=11 // pred_check_branch
          %304 = sbr.rel (%p302) target = $region16
        $region15: #{tpu_custom_call.1} parent=11 // pred_region
          _
        $region16: #{tpu_custom_call.1} parent=11 // pred_fallthru
          _
        // Predicated region
        $region17: #{tpu_custom_call.1} parent=11 // pred_check
          %p305 = pneg %p114
        $region18: #{tpu_custom_call.1} parent=11 // pred_check_branch
          %307 = sbr.rel (%p305) target = $region20
        $region19: #{tpu_custom_call.1} parent=11 // pred_region
          _
        $region20: #{tpu_custom_call.1} parent=11 // pred_fallthru
          _
        // Predicated region
        $region21: #{tpu_custom_call.1} parent=11 // pred_check
          %p308 = pneg %p135
        $region22: #{tpu_custom_call.1} parent=11 // pred_check_branch
          %310 = sbr.rel (%p308) target = $region24
        $region23: #{tpu_custom_call.1} parent=11 // pred_region
          _
        $region24: #{tpu_custom_call.1} parent=11 // pred_fallthru
          _
        // Predicated region
        $region25: #{tpu_custom_call.1} parent=11 // pred_check
          %p311 = pneg %p156
        $region26: #{tpu_custom_call.1} parent=11 // pred_check_branch
          %313 = sbr.rel (%p311) target = $region28
        $region27: #{tpu_custom_call.1} parent=11 // pred_region
          _
        $region28: #{tpu_custom_call.1} parent=11 // pred_fallthru
          _
        // Predicated region
        $region29: #{tpu_custom_call.1} parent=11 // pred_check
          %p314 = pneg %p177
        $region30: #{tpu_custom_call.1} parent=11 // pred_check_branch
          %316 = sbr.rel (%p314) target = $region32
        $region31: #{tpu_custom_call.1} parent=11 // pred_region
          _
        $region32: #{tpu_custom_call.1} parent=11 // pred_fallthru
          _
        // Predicated region
        $region33: #{tpu_custom_call.1} parent=11 // pred_check
          %p317 = pneg %p198
        $region34: #{tpu_custom_call.1} parent=11 // pred_check_branch
          %319 = sbr.rel (%p317) target = $region36
        $region35: #{tpu_custom_call.1} parent=11 // pred_region
          _
        $region36: #{tpu_custom_call.1} parent=11 // pred_fallthru
          _
        // Predicated region
        $region37: #{tpu_custom_call.1} parent=11 // pred_check
          %p320 = pneg %p219
        $region38: #{tpu_custom_call.1} parent=11 // pred_check_branch
          %322 = sbr.rel (%p320) target = $region40
        $region39: #{tpu_custom_call.1} parent=11 // pred_region
          _
        $region40: #{tpu_custom_call.1} parent=11 // pred_fallthru
          _
        // Predicated region
        $region41: #{tpu_custom_call.1} parent=11 // pred_check
          %p323 = pneg %p240
        $region42: #{tpu_custom_call.1} parent=11 // pred_check_branch
          %325 = sbr.rel (%p323) target = $region44
        $region43: #{tpu_custom_call.1} parent=11 // pred_region
          _
        $region44: #{tpu_custom_call.1} parent=11 // pred_fallthru
          _
        // Predicated region
        $region45: #{tpu_custom_call.1} parent=11 // pred_check
          %p326 = pneg %p261
        $region46: #{tpu_custom_call.1} parent=11 // pred_check_branch
          %328 = sbr.rel (%p326) target = $region48
        $region47: #{tpu_custom_call.1} parent=11 // pred_region
          _
        $region48: #{tpu_custom_call.1} parent=11 // pred_fallthru
          _
      $region12: #{tpu_custom_call.1} parent=5 // pred_fallthru
        _
      %p329 = scmp.lt.s32.totalorder %s20, 4
      // Predicated region
      $region49: #{tpu_custom_call.1} parent=5 // pred_check
        %p330 = pneg %p329
      $region50: #{tpu_custom_call.1} parent=5 // pred_check_branch
        %332 = sbr.rel (%p330) target = $region52
      $region51: #{tpu_custom_call.1} parent=5 // pred_region
        // Predicated region
        $region53: #{tpu_custom_call.1} parent=51 // pred_check
          %p333 = pneg %p40
        $region54: #{tpu_custom_call.1} parent=51 // pred_check_branch
          %335 = sbr.rel (%p333) target = $region56
        $region55: #{tpu_custom_call.1} parent=51 // pred_region
          %s336 = smul.u32 8, %s20
          %p337 = scmp.lt.s32.totalorder %s336, 31
          %s338 = scalar_select %p337, %s336, 31
          %s339 = smul.addr %s338, 8
          %s340 = scalar_lea.vmem %s0, %s339
          %s341 = smul.u32 8, %s20
        $region56: #{tpu_custom_call.1} parent=51 // pred_fallthru
          _
        // Predicated region
        $region57: #{tpu_custom_call.1} parent=51 // pred_check
          %p342 = pneg %p66
        $region58: #{tpu_custom_call.1} parent=51 // pred_check_branch
          %344 = sbr.rel (%p342) target = $region60
        $region59: #{tpu_custom_call.1} parent=51 // pred_region
          %p345 = scmp.lt.s32.totalorder %s20, 3
          %s346 = scalar_select %p345, %s20, 3
          %s347 = smul.addr %s346, 8
          %s348 = scalar_lea.vmem %s1, %s347
        $region60: #{tpu_custom_call.1} parent=51 // pred_fallthru
          _
      $region52: #{tpu_custom_call.1} parent=5 // pred_fallthru
        _
      %p349 = scmp.le.s32.totalorder 1, %s20
      %p350 = scmp.lt.s32.totalorder %s20, 5
      %p351 = pnand %p349, %p350
      %p352 = pneg %p351
      // Predicated region
      $region61: #{tpu_custom_call.1} parent=5 // pred_check
        _
      $region62: #{tpu_custom_call.1} parent=5 // pred_check_branch
        %354 = sbr.rel (%p351) target = $region64
      $region63: #{tpu_custom_call.1} parent=5 // pred_region
        %s355 = ssub.s32 %s20, 1
        %s356 = smul.u32 8, %s25
        %p357 = scmp.lt.s32.totalorder %s356, 31
        %s358 = scalar_select %p357, %s356, 31
        %s359 = smul.addr %s358, 8
        %s360 = scalar_lea.vmem %s0, %s359
        %p361 = pneg %p46
        %p362 = pneg %p43
        %p363 = scmp.lt.s32.totalorder %s25, 3
        %s364 = scalar_select %p363, %s25, 3
        %s365 = smul.addr %s364, 8
        %s366 = scalar_lea.vmem %s1, %s365
        %p367 = pneg %p72
        %p368 = pneg %p69
        %p369 = pneg %p93
        %p370 = pneg %p90
        %p371 = pneg %p114
        %p372 = pneg %p111
        %p373 = pneg %p135
        %p374 = pneg %p132
        %p375 = pneg %p156
        %p376 = pneg %p153
        %p377 = pneg %p177
        %p378 = pneg %p174
        %p379 = pneg %p198
        %p380 = pneg %p195
        %p381 = pneg %p219
        %p382 = pneg %p216
        %p383 = pneg %p240
        %p384 = pneg %p237
        %p385 = pneg %p261
        %p386 = pneg %p258
        %p387 = pneg %p287
        %p388 = pneg %p284
        %s389 = sand.u32 %s274, 1
        %s390 = scalar_lea.sflag [#allocation3], %s389
        %s391 = sand.u32 %s274, 1
        %s392 = smul.addr %s391, 8
        %s393 = scalar_lea.vmem [#allocation2], %s392
        %s394 = smul.u32 8, %s25
        %p395 = scmp.lt.s32.totalorder %s394, 31
        %s396 = scalar_select %p395, %s394, 31
        %s397 = smul.addr %s396, 8
        %s398 = scalar_lea.vmem %s0, %s397
        %s399 = smul.u32 8, %s25
        %p400 = scmp.lt.s32.totalorder %s25, 3
        %s401 = scalar_select %p400, %s25, 3
        %s402 = smul.addr %s401, 8
        %s403 = scalar_lea.vmem %s1, %s402
        %v405 = vld [vmem:[%s398] sm:$0xff]
        %v406 = vld [vmem:[%s398 + $0x8] sm:$0xff]
        %v407 = vld [vmem:[%s398 + $0x10] sm:$0xff]
        %v408 = vld [vmem:[%s398 + $0x18] sm:$0xff]
        %v409 = vld [vmem:[%s398 + $0x20] sm:$0xff]
        %v410 = vld [vmem:[%s398 + $0x28] sm:$0xff]
        %v411 = vld [vmem:[%s398 + $0x30] sm:$0xff]
        %v412 = vld [vmem:[%s398 + $0x38] sm:$0xff]
        %v413 = vld [vmem:[%s2] sm:$0x1]
        %v415 = vperm.slane %v413, 0
        %v417 = vsub.f32 %v405, %v415
        %v418 = vsub.f32 %v406, %v415
        %v419 = vsub.f32 %v407, %v415
        %v420 = vsub.f32 %v408, %v415
        %v421 = vsub.f32 %v409, %v415
        %v422 = vsub.f32 %v410, %v415
        %v423 = vsub.f32 %v411, %v415
        %v424 = vsub.f32 %v412, %v415
        %v425 = vld [vmem:[%s3] sm:$0x1]
        %v426 = vmul.f32 %v417, %v417
        %v427 = vmul.f32 %v418, %v418
        %v428 = vmul.f32 %v419, %v419
        %v429 = vmul.f32 %v420, %v420
        %v430 = vmul.f32 %v421, %v421
        %v431 = vmul.f32 %v422, %v422
        %v432 = vmul.f32 %v423, %v423
        %v433 = vmul.f32 %v424, %v424
        %v434 = vld [vmem:[%s4] sm:$0x1]
        %v436 = vperm.slane %v434, 0
        %v438 = vmul.f32 %v426, %v436
        %v439 = vmul.f32 %v427, %v436
        %v440 = vmul.f32 %v428, %v436
        %v441 = vmul.f32 %v429, %v436
        %v442 = vmul.f32 %v430, %v436
        %v443 = vmul.f32 %v431, %v436
        %v444 = vmul.f32 %v432, %v436
        %v445 = vmul.f32 %v433, %v436
        %v447 = vperm.slane %v425, 0
        %v449 = vsub.f32 %v447, %v438
        %v450 = vsub.f32 %v447, %v439
        %v451 = vsub.f32 %v447, %v440
        %v452 = vsub.f32 %v447, %v441
        %v453 = vsub.f32 %v447, %v442
        %v454 = vsub.f32 %v447, %v443
        %v455 = vsub.f32 %v447, %v444
        %v456 = vsub.f32 %v447, %v445
        %vm457 = vcmask 130048
        %v458 = vsel %vm457, %v449, 0.0
        %459 = vadd.xlane.f32.xlu0 %v458
        %v460 = vpop.xlane.xlu0 %459
        %v461 = vsel %vm457, %v450, 0.0
        %462 = vadd.xlane.f32.xlu0 %v461
        %v463 = vpop.xlane.xlu0 %462
        %v464 = vsel %vm457, %v451, 0.0
        %465 = vadd.xlane.f32.xlu0 %v464
        %v466 = vpop.xlane.xlu0 %465
        %v467 = vsel %vm457, %v452, 0.0
        %468 = vadd.xlane.f32.xlu0 %v467
        %v469 = vpop.xlane.xlu0 %468
        %v470 = vsel %vm457, %v453, 0.0
        %471 = vadd.xlane.f32.xlu0 %v470
        %v472 = vpop.xlane.xlu0 %471
        %v473 = vsel %vm457, %v454, 0.0
        %474 = vadd.xlane.f32.xlu0 %v473
        %v475 = vpop.xlane.xlu0 %474
        %v476 = vsel %vm457, %v455, 0.0
        %477 = vadd.xlane.f32.xlu0 %v476
        %v478 = vpop.xlane.xlu0 %477
        %v479 = vsel %vm457, %v456, 0.0
        %480 = vadd.xlane.f32.xlu0 %v479
        %v481 = vpop.xlane.xlu0 %480
        %v482 = vpack.c.bf16 %v406, %v405
        %v483 = vpack.c.bf16 %v408, %v407
        %v484 = vpack.c.bf16 %v410, %v409
        %v485 = vpack.c.bf16 %v412, %v411
        %v486 = vld [vmem:[%s5] sm:$0xf]
        %v487 = vld [vmem:[%s5 + $0x4] sm:$0xf]
        %v488 = vld [vmem:[%s6] sm:$0x1]
        %v490 = vperm.slane %v488, 0
        %v494 = vunpack.c.l.b16 %v486
        %v495 = vunpack.c.l.b16 %v487
        %v496 = vpack.c.b16 %v495, %v494
        %v499 = vsel %vm457, %v482, 0
        %v502 = vsel %vm457, %v483, 0
        %v505 = vsel %vm457, %v484, 0
        %v508 = vsel %vm457, %v485, 0
        %510 = vmatpush.bf16.msra.mxu0 0
        %511 = vmatpush.bf16.msra.mxu0 0
        %512 = vmatpush.bf16.msra.mxu0 0
        %513 = vmatpush.bf16.msra.mxu0 0
        %514 = vmatpush.bf16.msra.mxu0 0
        %515 = vmatpush.bf16.msra.mxu0 0
        %516 = vmatpush.bf16.msra.mxu0 0
        %517 = vmatpush.bf16.msra.mxu0 %v496
        %518 = vmatmul.bf16.gmra.mxu0 %v499
        %v519 = vpop.f32.mrf.mxu0
        %v520 = vadd.f32 %v490, %v519
        %v521 = vpop.f32.mrf.mxu0
        %v522 = vadd.f32 %v490, %v521
        %523 = vmatmul.bf16.gmra.mxu0 %v502
        %v524 = vpop.f32.mrf.mxu0
        %v525 = vadd.f32 %v490, %v524
        %v526 = vpop.f32.mrf.mxu0
        %v527 = vadd.f32 %v490, %v526
        %528 = vmatmul.bf16.gmra.mxu0 %v505
        %v529 = vpop.f32.mrf.mxu0
        %v530 = vadd.f32 %v490, %v529
        %v531 = vpop.f32.mrf.mxu0
        %v532 = vadd.f32 %v490, %v531
        %533 = vmatmul.bf16.gmra.mxu0 %v508
        %v534 = vpop.f32.mrf.mxu0
        %v535 = vadd.f32 %v490, %v534
        %v536 = vpop.f32.mrf.mxu0
        %v537 = vadd.f32 %v490, %v536
        %538 = vdwg.mxu0
        %v539 = vmax.f32 %v520, 0.0
        %v540 = vmax.f32 %v522, 0.0
        %v541 = vmax.f32 %v525, 0.0
        %v542 = vmax.f32 %v527, 0.0
        %v543 = vmax.f32 %v530, 0.0
        %v544 = vmax.f32 %v532, 0.0
        %v545 = vmax.f32 %v535, 0.0
        %v546 = vmax.f32 %v537, 0.0
        %v547 = vpack.c.bf16 %v540, %v539
        %v548 = vpack.c.bf16 %v542, %v541
        %v549 = vpack.c.bf16 %v544, %v543
        %v550 = vpack.c.bf16 %v546, %v545
        %v551 = vld [vmem:[%s7] sm:$0xf]
        %v552 = vld [vmem:[%s7 + $0x4] sm:$0xf]
        %v553 = vld [vmem:[%s7 + $0x8] sm:$0xf]
        %v554 = vld [vmem:[%s7 + $0xc] sm:$0xf]
        %v555 = vld [vmem:[%s8] sm:$0x1]
        %v557 = vperm.slane %v555, 0
        %v563 = vunpack.c.l.b16 %v551
        %v564 = vunpack.c.l.b16 %v552
        %v565 = vunpack.c.l.b16 %v553
        %v566 = vunpack.c.l.b16 %v554
        %v567 = vpack.c.b16 %v564, %v563
        %v568 = vpack.c.b16 %v566, %v565
        %vm571 = vcmask 261120
        %v573 = vsel %vm571, %v547, 0
        %v576 = vsel %vm571, %v548, 0
        %v579 = vsel %vm571, %v549, 0
        %v582 = vsel %vm571, %v550, 0
        %584 = vmatpush.bf16.msra.mxu0 0
        %585 = vmatpush.bf16.msra.mxu0 0
        %586 = vmatpush.bf16.msra.mxu0 0
        %587 = vmatpush.bf16.msra.mxu0 0
        %588 = vmatpush.bf16.msra.mxu0 0
        %589 = vmatpush.bf16.msra.mxu0 0
        %590 = vmatpush.bf16.msra.mxu0 %v568
        %591 = vmatpush.bf16.msra.mxu0 %v567
        %592 = vmatmul.bf16.gmra.mxu0 %v573
        %v593 = vpop.f32.mrf.mxu0
        %v594 = vadd.f32 %v557, %v593
        %v595 = vpop.f32.mrf.mxu0
        %v596 = vadd.f32 %v557, %v595
        %597 = vmatmul.bf16.gmra.mxu0 %v576
        %v598 = vpop.f32.mrf.mxu0
        %v599 = vadd.f32 %v557, %v598
        %v600 = vpop.f32.mrf.mxu0
        %v601 = vadd.f32 %v557, %v600
        %602 = vmatmul.bf16.gmra.mxu0 %v579
        %v603 = vpop.f32.mrf.mxu0
        %v604 = vadd.f32 %v557, %v603
        %v605 = vpop.f32.mrf.mxu0
        %v606 = vadd.f32 %v557, %v605
        %607 = vmatmul.bf16.gmra.mxu0 %v582
        %v608 = vpop.f32.mrf.mxu0
        %v609 = vadd.f32 %v557, %v608
        %v610 = vpop.f32.mrf.mxu0
        %v611 = vadd.f32 %v557, %v610
        %612 = vdwg.mxu0
        %v613 = vmax.f32 %v594, 0.0
        %v614 = vmax.f32 %v596, 0.0
        %v615 = vmax.f32 %v599, 0.0
        %v616 = vmax.f32 %v601, 0.0
        %v617 = vmax.f32 %v604, 0.0
        %v618 = vmax.f32 %v606, 0.0
        %v619 = vmax.f32 %v609, 0.0
        %v620 = vmax.f32 %v611, 0.0
        %v621 = vpack.c.bf16 %v614, %v613
        %v622 = vpack.c.bf16 %v616, %v615
        %v623 = vpack.c.bf16 %v618, %v617
        %v624 = vpack.c.bf16 %v620, %v619
        %v625 = vld [vmem:[%s9] sm:$0xf]
        %v626 = vld [vmem:[%s9 + $0x4] sm:$0xf]
        %v627 = vld [vmem:[%s9 + $0x8] sm:$0xf]
        %v628 = vld [vmem:[%s9 + $0xc] sm:$0xf]
        %v629 = vld [vmem:[%s10] sm:$0x1]
        %v631 = vperm.slane %v629, 0
        %v637 = vunpack.c.l.b16 %v625
        %v638 = vunpack.c.l.b16 %v626
        %v639 = vunpack.c.l.b16 %v627
        %v640 = vunpack.c.l.b16 %v628
        %v641 = vpack.c.b16 %v638, %v637
        %v642 = vpack.c.b16 %v640, %v639
        %v646 = vsel %vm571, %v621, 0
        %v649 = vsel %vm571, %v622, 0
        %v652 = vsel %vm571, %v623, 0
        %v655 = vsel %vm571, %v624, 0
        %657 = vmatpush.bf16.msra.mxu0 0
        %658 = vmatpush.bf16.msra.mxu0 0
        %659 = vmatpush.bf16.msra.mxu0 0
        %660 = vmatpush.bf16.msra.mxu0 0
        %661 = vmatpush.bf16.msra.mxu0 0
        %662 = vmatpush.bf16.msra.mxu0 0
        %663 = vmatpush.bf16.msra.mxu0 %v642
        %664 = vmatpush.bf16.msra.mxu0 %v641
        %665 = vmatmul.bf16.gmra.mxu0 %v646
        %v666 = vpop.f32.mrf.mxu0
        %v667 = vadd.f32 %v631, %v666
        %v668 = vpop.f32.mrf.mxu0
        %v669 = vadd.f32 %v631, %v668
        %670 = vmatmul.bf16.gmra.mxu0 %v649
        %v671 = vpop.f32.mrf.mxu0
        %v672 = vadd.f32 %v631, %v671
        %v673 = vpop.f32.mrf.mxu0
        %v674 = vadd.f32 %v631, %v673
        %675 = vmatmul.bf16.gmra.mxu0 %v652
        %v676 = vpop.f32.mrf.mxu0
        %v677 = vadd.f32 %v631, %v676
        %v678 = vpop.f32.mrf.mxu0
        %v679 = vadd.f32 %v631, %v678
        %680 = vmatmul.bf16.gmra.mxu0 %v655
        %v681 = vpop.f32.mrf.mxu0
        %v682 = vadd.f32 %v631, %v681
        %v683 = vpop.f32.mrf.mxu0
        %v684 = vadd.f32 %v631, %v683
        %685 = vdwg.mxu0
        %v686 = vld [vmem:[%s403] sm:$0xff]
        %v688 = vrot.slane %v686, 1
        %v689 = vrot.slane %v686, 2
        %v690 = vrot.slane %v686, 3
        %v691 = vrot.slane %v686, 4
        %v692 = vrot.slane %v686, 5
        %v693 = vrot.slane %v686, 6
        %v694 = vrot.slane %v686, 7
        %v695 = vand.u32 2147483647, %v667
        %v696 = vand.u32 2147483647, %v669
        %v697 = vand.u32 2147483647, %v672
        %v698 = vand.u32 2147483647, %v674
        %v699 = vand.u32 2147483647, %v677
        %v700 = vand.u32 2147483647, %v679
        %v701 = vand.u32 2147483647, %v682
        %v702 = vand.u32 2147483647, %v684
        %v703 = vsub.f32 0.0, %v695
        %v704 = vsub.f32 0.0, %v696
        %v705 = vsub.f32 0.0, %v697
        %v706 = vsub.f32 0.0, %v698
        %v707 = vsub.f32 0.0, %v699
        %v708 = vsub.f32 0.0, %v700
        %v709 = vsub.f32 0.0, %v701
        %v710 = vsub.f32 0.0, %v702
        %v711 = vmul.f32 %v703, 1.442695
        %v712 = vpow.pop %v711
        %v713 = vmul.f32 %v704, 1.442695
        %v714 = vpow.pop %v713
        %v715 = vmul.f32 %v705, 1.442695
        %v716 = vpow.pop %v715
        %v717 = vmul.f32 %v706, 1.442695
        %v718 = vpow.pop %v717
        %v719 = vmul.f32 %v707, 1.442695
        %v720 = vpow.pop %v719
        %v721 = vmul.f32 %v708, 1.442695
        %v722 = vpow.pop %v721
        %v723 = vmul.f32 %v709, 1.442695
        %v724 = vpow.pop %v723
        %v725 = vmul.f32 %v710, 1.442695
        %v726 = vpow.pop %v725
        %v727 = vadd.f32 %v712, 1.0
        %v728 = vlog2.pop %v727
        %v729 = vmul.f32 %v728, 0.6931472
        %v730 = vmul.f32 -0.5, %v712
        %v731 = vadd.f32 %v730, 1.0
        %v732 = vmul.f32 %v731, %v712
        %v733 = vand.u32 2147483647, %v712
        %vm734 = vcmp.lt.f32.partialorder %v733, 0.0004427343
        %v735 = vsel %vm734, %v732, %v729
        %v736 = vadd.f32 %v714, 1.0
        %v737 = vlog2.pop %v736
        %v738 = vmul.f32 %v737, 0.6931472
        %v739 = vmul.f32 -0.5, %v714
        %v740 = vadd.f32 %v739, 1.0
        %v741 = vmul.f32 %v740, %v714
        %v742 = vand.u32 2147483647, %v714
        %vm743 = vcmp.lt.f32.partialorder %v742, 0.0004427343
        %v744 = vsel %vm743, %v741, %v738
        %v745 = vadd.f32 %v716, 1.0
        %v746 = vlog2.pop %v745
        %v747 = vmul.f32 %v746, 0.6931472
        %v748 = vmul.f32 -0.5, %v716
        %v749 = vadd.f32 %v748, 1.0
        %v750 = vmul.f32 %v749, %v716
        %v751 = vand.u32 2147483647, %v716
        %vm752 = vcmp.lt.f32.partialorder %v751, 0.0004427343
        %v753 = vsel %vm752, %v750, %v747
        %v754 = vadd.f32 %v718, 1.0
        %v755 = vlog2.pop %v754
        %v756 = vmul.f32 %v755, 0.6931472
        %v757 = vmul.f32 -0.5, %v718
        %v758 = vadd.f32 %v757, 1.0
        %v759 = vmul.f32 %v758, %v718
        %v760 = vand.u32 2147483647, %v718
        %vm761 = vcmp.lt.f32.partialorder %v760, 0.0004427343
        %v762 = vsel %vm761, %v759, %v756
        %v763 = vadd.f32 %v720, 1.0
        %v764 = vlog2.pop %v763
        %v765 = vmul.f32 %v764, 0.6931472
        %v766 = vmul.f32 -0.5, %v720
        %v767 = vadd.f32 %v766, 1.0
        %v768 = vmul.f32 %v767, %v720
        %v769 = vand.u32 2147483647, %v720
        %vm770 = vcmp.lt.f32.partialorder %v769, 0.0004427343
        %v771 = vsel %vm770, %v768, %v765
        %v772 = vadd.f32 %v722, 1.0
        %v773 = vlog2.pop %v772
        %v774 = vmul.f32 %v773, 0.6931472
        %v775 = vmul.f32 -0.5, %v722
        %v776 = vadd.f32 %v775, 1.0
        %v777 = vmul.f32 %v776, %v722
        %v778 = vand.u32 2147483647, %v722
        %vm779 = vcmp.lt.f32.partialorder %v778, 0.0004427343
        %v780 = vsel %vm779, %v777, %v774
        %v781 = vadd.f32 %v724, 1.0
        %v782 = vlog2.pop %v781
        %v783 = vmul.f32 %v782, 0.6931472
        %v784 = vmul.f32 -0.5, %v724
        %v785 = vadd.f32 %v784, 1.0
        %v786 = vmul.f32 %v785, %v724
        %v787 = vand.u32 2147483647, %v724
        %vm788 = vcmp.lt.f32.partialorder %v787, 0.0004427343
        %v789 = vsel %vm788, %v786, %v783
        %v790 = vadd.f32 %v726, 1.0
        %v791 = vlog2.pop %v790
        %v792 = vmul.f32 %v791, 0.6931472
        %v793 = vmul.f32 -0.5, %v726
        %v794 = vadd.f32 %v793, 1.0
        %v795 = vmul.f32 %v794, %v726
        %v796 = vand.u32 2147483647, %v726
        %vm797 = vcmp.lt.f32.partialorder %v796, 0.0004427343
        %v798 = vsel %vm797, %v795, %v792
        %v799 = vmax.f32 %v667, 0.0
        %v800 = vmax.f32 %v669, 0.0
        %v801 = vmax.f32 %v672, 0.0
        %v802 = vmax.f32 %v674, 0.0
        %v803 = vmax.f32 %v677, 0.0
        %v804 = vmax.f32 %v679, 0.0
        %v805 = vmax.f32 %v682, 0.0
        %v806 = vmax.f32 %v684, 0.0
        %v807 = vperm.slane %v686, 0
        %v808 = vperm.slane %v688, 0
        %v809 = vperm.slane %v689, 0
        %v810 = vperm.slane %v690, 0
        %v811 = vperm.slane %v691, 0
        %v812 = vperm.slane %v692, 0
        %v813 = vperm.slane %v693, 0
        %v814 = vperm.slane %v694, 0
        %v823 = vmul.f32 %v667, %v807
        %v824 = vmul.f32 %v669, %v808
        %v825 = vmul.f32 %v672, %v809
        %v826 = vmul.f32 %v674, %v810
        %v827 = vmul.f32 %v677, %v811
        %v828 = vmul.f32 %v679, %v812
        %v829 = vmul.f32 %v682, %v813
        %v830 = vmul.f32 %v684, %v814
        %v831 = vsub.f32 %v799, %v823
        %v832 = vsub.f32 %v800, %v824
        %v833 = vsub.f32 %v801, %v825
        %v834 = vsub.f32 %v802, %v826
        %v835 = vsub.f32 %v803, %v827
        %v836 = vsub.f32 %v804, %v828
        %v837 = vsub.f32 %v805, %v829
        %v838 = vsub.f32 %v806, %v830
        %v839 = vadd.f32 %v831, %v735
        %v840 = vadd.f32 %v832, %v744
        %v841 = vadd.f32 %v833, %v753
        %v842 = vadd.f32 %v834, %v762
        %v843 = vadd.f32 %v835, %v771
        %v844 = vadd.f32 %v836, %v780
        %v845 = vadd.f32 %v837, %v789
        %v846 = vadd.f32 %v838, %v798
        %847 = vadd.xlane.f32.xlu0 %v839
        %v848 = vpop.xlane.xlu0 %847
        %849 = vadd.xlane.f32.xlu0 %v840
        %v850 = vpop.xlane.xlu0 %849
        %851 = vadd.xlane.f32.xlu0 %v841
        %v852 = vpop.xlane.xlu0 %851
        %853 = vadd.xlane.f32.xlu0 %v842
        %v854 = vpop.xlane.xlu0 %853
        %855 = vadd.xlane.f32.xlu0 %v843
        %v856 = vpop.xlane.xlu0 %855
        %857 = vadd.xlane.f32.xlu0 %v844
        %v858 = vpop.xlane.xlu0 %857
        %859 = vadd.xlane.f32.xlu0 %v845
        %v860 = vpop.xlane.xlu0 %859
        %861 = vadd.xlane.f32.xlu0 %v846
        %v862 = vpop.xlane.xlu0 %861
        %v863 = vsub.f32 0.0, %v848
        %v864 = vsub.f32 0.0, %v850
        %v865 = vsub.f32 0.0, %v852
        %v866 = vsub.f32 0.0, %v854
        %v867 = vsub.f32 0.0, %v856
        %v868 = vsub.f32 0.0, %v858
        %v869 = vsub.f32 0.0, %v860
        %v870 = vsub.f32 0.0, %v862
        %v871 = vadd.f32 %v460, %v863
        %v872 = vadd.f32 %v463, %v864
        %v873 = vadd.f32 %v466, %v865
        %v874 = vadd.f32 %v469, %v866
        %v875 = vadd.f32 %v472, %v867
        %v876 = vadd.f32 %v475, %v868
        %v877 = vadd.f32 %v478, %v869
        %v878 = vadd.f32 %v481, %v870
        %v887 = vlaneseq
        %v888 = vand.u32 %v887, 127
        %v889 = vperm.slane %v871, %v888
        %v890 = vperm.slane %v872, %v888
        %v891 = vperm.slane %v873, %v888
        %v892 = vperm.slane %v874, %v888
        %v893 = vperm.slane %v875, %v888
        %v894 = vperm.slane %v876, %v888
        %v895 = vperm.slane %v877, %v888
        %v896 = vperm.slane %v878, %v888
        %vm897 = vcmask 1041409
        %v898 = vsel %vm897, %v890, %v889
        %vm899 = vcmask 1042434
        %v900 = vsel %vm899, %v891, %v898
        %vm901 = vcmask 1043459
        %v902 = vsel %vm901, %v892, %v900
        %vm903 = vcmask 1044484
        %v904 = vsel %vm903, %v893, %v902
        %vm905 = vcmask 1045509
        %v906 = vsel %vm905, %v894, %v904
        %vm907 = vcmask 1046534
        %v908 = vsel %vm907, %v895, %v906
        %vm909 = vcmask 1047559
        %v910 = vsel %vm909, %v896, %v908
        %vm912 = vcmask 64512
        %913 = vst.msk [vmem:[%s393] sm:$0xff] %vm912, %v910
        %s914 = sand.u32 %s274, 1
        %s915 = scalar_lea.sflag [#allocation3], %s914
        %s916 = sand.u32 %s274, 1
        %s917 = smul.addr %s916, 8
        %s918 = scalar_lea.vmem [#allocation2], %s917
        // Predicated region
        $region65: #{tpu_custom_call.1} parent=63 // pred_check
          %p919 = pneg %p284
        $region66: #{tpu_custom_call.1} parent=63 // pred_check_branch
          %921 = sbr.rel (%p919) target = $region68
        $region67: #{tpu_custom_call.1} parent=63 // pred_region
          %923 = vsyncadd %s915, 0
          %s924 = smul.addr %s25, 8
          %s925 = scalar_lea.hbm %s11, %s924
          %s927 = sshll.u32 %s918, 4
          %s928 = int_to_ptr.vmem [resolvable:$true] %s927
          %s929 = sshll.u32 %s925, 4
          %s930 = int_to_ptr.hbm [resolvable:$true] %s929
          %932 = dma.vmem_to_hbm [thread:$0]  %s928, 128, %s930, %s915
        $region68: #{tpu_custom_call.1} parent=63 // pred_fallthru
          _
      $region64: #{tpu_custom_call.1} parent=5 // pred_fallthru
        _
      %p933 = scmp.le.s32.totalorder 2, %s20
      // Predicated region
      $region69: #{tpu_custom_call.1} parent=5 // pred_check
        %p934 = pneg %p933
      $region70: #{tpu_custom_call.1} parent=5 // pred_check_branch
        %936 = sbr.rel (%p934) target = $region72
      $region71: #{tpu_custom_call.1} parent=5 // pred_region
        %s937 = ssub.s32 %s20, 2
        // Predicated region
        $region73: #{tpu_custom_call.1} parent=71 // pred_check
          %p938 = pneg %p290
        $region74: #{tpu_custom_call.1} parent=71 // pred_check_branch
          %940 = sbr.rel (%p938) target = $region76
        $region75: #{tpu_custom_call.1} parent=71 // pred_region
          %s941 = sand.u32 %s275, 1
          %s942 = scalar_lea.sflag [#allocation3], %s941
          %s943 = sand.u32 %s275, 1
          %s944 = smul.addr %s943, 8
          %s945 = scalar_lea.vmem [#allocation2], %s944
          %947 = dma.done %s942, 128
        $region76: #{tpu_custom_call.1} parent=71 // pred_fallthru
          _
      $region72: #{tpu_custom_call.1} parent=5 // pred_fallthru
        _
    $region6: #{tpu_custom_call.1} parent=1 // loop_footer
      %s24 = sadd.s32 1, %s20
    $region7: #{tpu_custom_call.1} parent=1 // loop_footer_branch
      %19 = sbr.rel target = $region3
    $region8: #{tpu_custom_call.1} parent=1 // loop_exit
      _
    %948 = vsyncpa [#allocation3], 1
    %s949 = scalar_lea.sflag [#allocation3], 1
    %950 = vsyncpa %s949, 1

</llo_original>
